<compile_context>
chip_gen: v5e
topology: v5e:2x2
jax: 0.10.0
libtpu: 0.0.40
codegen_flags: <defaults>
</compile_context>

<pallas_src>
import jax
import jax.numpy as jnp
from jax.experimental import pallas as pl
from jax.experimental.pallas import tpu as pltpu


_SUBLANE = 8  # f32 sublane pack; the (rows, T) matmul result is always f32.


def _round_up(x, m):
    return ((x + m - 1) // m) * m


# --------------------------------------------------------------------------- kernels
def resblock_proj_kernel(x_ref, wcat_ref, b1_ref, w2_ref, b2_ref, o_ref):
    """Projection-shortcut ResBlock on one (Cin, T) spatial slab of one batch element.

    x_ref    : (1, Cin, T)          input slab, spatial on lanes
    wcat_ref : (split + Cout, Cin)  [w1 (BN-folded, zero-padded to `split` rows) ; ws (BN-folded)]
    b1_ref   : (Cout, 1)            res-branch first bias (BN-folded)
    w2_ref   : (Cout, Cout)         second conv (BN-folded)
    b2_ref   : (Cout, 1)            second bias with the shortcut bias folded in
    o_ref    : (1, Cout, T)         NCHW-native output slab
    """
    cout = w2_ref.shape[0]
    split = wcat_ref.shape[0] - cout            # sublane-aligned start of shortcut rows
    x = x_ref[0]                                                    # (Cin, T)

    # Shared-LHS fused matmul: res-branch rows [:cout], shortcut rows [split:].
    s = jnp.dot(wcat_ref[...], x, preferred_element_type=jnp.float32)
    h = jnp.maximum(s[:cout, :] + b1_ref[...], 0.0)                 # (Cout, T) f32
    idn = s[split:, :]                                              # aligned free view

    r = jnp.dot(w2_ref[...], h.astype(w2_ref.dtype),
                preferred_element_type=jnp.float32) + b2_ref[...]   # (Cout, T) f32
    o_ref[0] = jnp.maximum(r + idn, 0.0).astype(o_ref.dtype)


def resblock_identity_kernel(x_ref, w1_ref, b1_ref, w2_ref, b2_ref, o_ref):
    """Identity-shortcut ResBlock (inplanes == planes): the residual is taken directly
    from the resident x slab — no identity matmul, no extra DMA."""
    x = x_ref[0]                                                    # (C, T)
    s = jnp.dot(w1_ref[...], x, preferred_element_type=jnp.float32) + b1_ref[...]
    h = jnp.maximum(s, 0.0)
    r = jnp.dot(w2_ref[...], h.astype(w2_ref.dtype),
                preferred_element_type=jnp.float32) + b2_ref[...]
    o_ref[0] = jnp.maximum(r + x.astype(jnp.float32), 0.0).astype(o_ref.dtype)


# --------------------------------------------------------------------------- wrapper
def _vmem_capacity_bytes():
    try:
        return int(pltpu.get_tpu_info().vmem_capacity_bytes)
    except Exception:
        try:
            kind = jax.devices()[0].device_kind.lower()
        except Exception:
            kind = ""
        # Generation-aware fallback: only v7x has 64 MiB/core; v5e/v6e have 128 MiB.
        return 64 * 1024 * 1024 if "v7" in kind else 128 * 1024 * 1024


def _pick_hw_tile(HW, max_hw_tile, fits):
    if HW <= 128:
        return HW                                    # full extent (legal block)
    cap = min((HW // 128) * 128, max(128, (max_hw_tile // 128) * 128))
    # Prefer exact divisors of HW (multiples of 128): no masked remainder tile.
    divisors = [t for t in range(128, cap + 1, 128) if HW % t == 0]
    for t in sorted(divisors, reverse=True):
        if fits(t):
            return t
    t = cap
    while t > 128 and not fits(t):
        t -= 128
    return t


def resblock_forward(x_nchw, params, *, max_hw_tile=2048, vmem_fraction=0.75,
                     compute_dtype=jnp.bfloat16):
    """x: [N, Cin, H, W] -> [N, Cout, H, W]; NCHW in, NCHW out, no transposes.

    compute_dtype defaults to bf16 (HBM + MXU throughput); accumulation, biases,
    ReLU and the residual add stay f32.
    """
    N, Cin, H, W = x_nchw.shape
    Cout = int(params["cout"])
    identity = bool(params["identity"])
    HW = H * W

    cdt = jnp.dtype(compute_dtype)
    out_dtype = x_nchw.dtype

    x3 = x_nchw.reshape(N, Cin, HW)                 # free, contiguous reshape
    if x3.dtype != cdt:
        x3 = x3.astype(cdt)
    wcat = params["wcat"].astype(cdt)               # (rows, Cin)
    w2 = params["w2"].astype(cdt)
    b1 = params["b1"].astype(jnp.float32)
    b2 = params["b2"].astype(jnp.float32)

    rows = wcat.shape[0]
    in_itemsize = cdt.itemsize
    out_itemsize = jnp.dtype(out_dtype).itemsize
    weight_bytes = (wcat.size + w2.size) * in_itemsize + (b1.size + b2.size) * 4

    # ---- VMEM-aware spatial tile: in/out slabs are double-buffered, constant weights
    #      are single-buffered, and the in-kernel f32 intermediates are counted.
    vmem_budget = int(_vmem_capacity_bytes() * vmem_fraction)

    def vmem_usage(t):
        xb = 2 * Cin * t * in_itemsize              # double-buffered input slab
        ob = 2 * Cout * t * out_itemsize            # double-buffered output slab
        inter = (rows + 3 * Cout) * t * 4           # s, h (f32), r / out (f32)
        inter += Cout * t * in_itemsize             # h cast to compute dtype
        if identity:
            inter += Cin * t * 4                    # residual x cast to f32
        return int(1.15 * (xb + ob + inter)) + weight_bytes

    t_hw = _pick_hw_tile(HW, max_hw_tile, lambda t: vmem_usage(t) <= vmem_budget)
    num_tiles = pl.cdiv(HW, t_hw)

    # Spatial-tile axis first: usually the larger / even axis, so the v7x megacore
    # split stays balanced even when N is 1 or odd. Both axes are independent.
    grid = (num_tiles, N)

    # ---- advisory cost estimate for the XLA scheduler.
    m_total = N * HW
    flops = 2 * m_total * Cin * rows + 2 * m_total * Cout * Cout + 5 * m_total * Cout
    bytes_accessed = (m_total * Cin * in_itemsize + m_total * Cout * out_itemsize
                      + weight_bytes)
    cost = pl.CostEstimate(flops=int(flops), transcendentals=0,
                           bytes_accessed=int(bytes_accessed))

    kernel = resblock_identity_kernel if identity else resblock_proj_kernel
    const2d = lambda t, n: (0, 0)
    single = pl.Buffered(1)     # constant index_map -> DMA'd once; no double buffer

    out3 = pl.pallas_call(
        kernel,
        out_shape=jax.ShapeDtypeStruct((N, Cout, HW), out_dtype),
        grid_spec=pltpu.PrefetchScalarGridSpec(
            num_scalar_prefetch=0,
            grid=grid,
            in_specs=[
                pl.BlockSpec((1, Cin, t_hw), lambda t, n: (n, 0, t)),        # x slab
                pl.BlockSpec((rows, Cin), const2d, pipeline_mode=single),    # wcat / w1
                pl.BlockSpec((Cout, 1), const2d, pipeline_mode=single),      # b1
                pl.BlockSpec((Cout, Cout), const2d, pipeline_mode=single),   # w2
                pl.BlockSpec((Cout, 1), const2d, pipeline_mode=single),      # b2 (+bs)
            ],
            out_specs=pl.BlockSpec((1, Cout, t_hw), lambda t, n: (n, 0, t)),
        ),
        compiler_params=pltpu.CompilerParams(
            dimension_semantics=("parallel", "parallel"),
            vmem_limit_bytes=vmem_budget,
        ),
        cost_estimate=cost,
    )(x3, wcat, b1, w2, b2)

    return out3.reshape(N, Cout, H, W)


# --------------------------------------------------------------------------- params
def fold_bn(w, b, gamma, beta, running_mean, running_var, eps=1e-5):
    """Fold eval-mode BatchNorm into a preceding 1x1 conv (w: [Cout, Cin], b: [Cout])."""
    scale = gamma / jnp.sqrt(running_var + eps)      # [Cout]
    return w * scale[:, None], (b - running_mean) * scale + beta


def make_params(key, inplanes, planes):
    """Deterministic synthetic params; BatchNorm at its nn.BatchNorm2d init state
    (eval mode, running stats), folded into the 1x1 convs."""
    ks = jax.random.split(key, 6)
    w1 = jax.random.normal(ks[0], (planes, inplanes), jnp.float32) * 0.1
    b1 = jax.random.normal(ks[1], (planes,), jnp.float32) * 0.1
    w2 = jax.random.normal(ks[2], (planes, planes), jnp.float32) * 0.1
    b2 = jax.random.normal(ks[3], (planes,), jnp.float32) * 0.1

    gamma = jnp.ones((planes,), jnp.float32)
    beta = jnp.zeros((planes,), jnp.float32)
    rmean = jnp.zeros((planes,), jnp.float32)
    rvar = jnp.ones((planes,), jnp.float32)

    w1f, b1f = fold_bn(w1, b1, gamma, beta, rmean, rvar)
    w2f, b2f = fold_bn(w2, b2, gamma, beta, rmean, rvar)

    identity = (inplanes == planes)
    if identity:
        wsf = bsf = None
        wcat = w1f                                   # no eye-matmul; residual comes from x
        b2k = b2f
    else:
        ws = jax.random.normal(ks[4], (planes, inplanes), jnp.float32) * 0.1
        bs = jax.random.normal(ks[5], (planes,), jnp.float32) * 0.1
        wsf, bsf = fold_bn(ws, bs, gamma, beta, rmean, rvar)
        # Shared-LHS fusion [w1 ; ws]; pad the split to the f32 sublane pack so the
        # in-kernel row split of the f32 intermediate is a free (aligned) view.
        split = _round_up(planes, _SUBLANE)
        pad = split - planes
        w1p = jnp.concatenate([w1f, jnp.zeros((pad, inplanes), jnp.float32)], 0) if pad else w1f
        wcat = jnp.concatenate([w1p, wsf], axis=0)   # (split + Cout, Cin)
        b2k = b2f + bsf                              # fold shortcut bias into b2

    return {
        "identity": identity, "cin": inplanes, "cout": planes,
        "wcat": wcat, "b1": b1f[:, None], "w2": w2f, "b2": b2k[:, None],
        # un-fused folded weights for the pure-JAX reference
        "ref": {"w1": w1f, "b1": b1f, "w2": w2f, "b2": b2f, "ws": wsf, "bs": bsf},
    }


# --------------------------------------------------------------------------- reference
def resblock_ref(x_nchw, params):
    """Pure-JAX reference (same eval-mode folded-BN semantics), computed un-fused."""
    p = params["ref"]
    N, Cin, H, W = x_nchw.shape
    C = int(params["cout"])
    x = x_nchw.reshape(N, Cin, H * W).astype(jnp.float32)
    if params["identity"]:
        idn = x
    else:
        idn = jnp.einsum("oc,ncm->nom", p["ws"], x) + p["bs"][None, :, None]
    h = jnp.maximum(jnp.einsum("oc,ncm->nom", p["w1"], x) + p["b1"][None, :, None], 0.0)
    r = jnp.einsum("oc,ncm->nom", p["w2"], h) + p["b2"][None, :, None]
    out = jnp.maximum(r + idn, 0.0)
    return out.reshape(N, C, H, W).astype(jnp.float32)


# --------------------------------------------------------------------------- test
if __name__ == "__main__":
    key = jax.random.PRNGKey(0)
    kx1, kx2, kp1, kp2 = jax.random.split(key, 4)

    # 1) Projection shortcut (inplanes != planes), f32 compute -> exact-ish check.
    N, inplanes, planes, S = 2, 4, 8, 16
    x = jax.random.normal(kx1, (N, inplanes, S, S), jnp.float32)
    params = make_params(kp1, inplanes, planes)
    out = jax.block_until_ready(resblock_forward(x, params, compute_dtype=jnp.float32))
    ref = resblock_ref(x, params)
    assert out.shape == (N, planes, S, S)
    err = float(jnp.max(jnp.abs(out.astype(jnp.float32) - ref)))
    assert jnp.allclose(out.astype(jnp.float32), ref, atol=1e-4, rtol=1e-4), err

    # 2) Identity shortcut (inplanes == planes), default bf16 compute path.
    x2 = jax.random.normal(kx2, (N, planes, S, S), jnp.float32)
    params2 = make_params(kp2, planes, planes)
    out2 = jax.block_until_ready(resblock_forward(x2, params2))    # bf16 default
    ref2 = resblock_ref(x2, params2)
    assert out2.shape == (N, planes, S, S)
    err2 = float(jnp.max(jnp.abs(out2.astype(jnp.float32) - ref2)))
    assert jnp.allclose(out2.astype(jnp.float32), ref2, atol=5e-2, rtol=5e-2), err2

    print("KERNEL_OK")
</pallas_src>

<mosaic_0001>
module attributes {stable_mosaic.version = 11 : i64} {
  func.func @resblock_proj_kernel(%arg0: i32, %arg1: i32, %arg2: memref<1x4x256xf32, #tpu.memory_space<vmem>>, %arg3: memref<16x4xf32, #tpu.memory_space<vmem>>, %arg4: memref<8x1xf32, #tpu.memory_space<vmem>>, %arg5: memref<8x8xf32, #tpu.memory_space<vmem>>, %arg6: memref<8x1xf32, #tpu.memory_space<vmem>>, %arg7: memref<1x8x256xf32, #tpu.memory_space<vmem>>) attributes {dimension_semantics = [#tpu.dimension_semantics<parallel>, #tpu.dimension_semantics<parallel>], iteration_bounds = array<i64: 1, 2>, scalar_prefetch = 0 : i64, scratch_operands = 0 : i64, tpu.core_type = #tpu.core_type<tc>, window_params = [{transform_indices = @transform_0, window_bounds = array<i64: 1, 4, 256>}, {pipeline_mode = #tpu.pipeline_mode<synchronous>, transform_indices = @transform_1, window_bounds = array<i64: 16, 4>}, {pipeline_mode = #tpu.pipeline_mode<synchronous>, transform_indices = @transform_2, window_bounds = array<i64: 8, 1>}, {pipeline_mode = #tpu.pipeline_mode<synchronous>, transform_indices = @transform_3, window_bounds = array<i64: 8, 8>}, {pipeline_mode = #tpu.pipeline_mode<synchronous>, transform_indices = @transform_4, window_bounds = array<i64: 8, 1>}, {transform_indices = @transform_5, window_bounds = array<i64: 1, 8, 256>}]} {
    %c0 = arith.constant 0 : index
    %c0_0 = arith.constant 0 : index
    %c0_1 = arith.constant 0 : index
    %0 = vector.load %arg2[%c0, %c0_0, %c0_1] : memref<1x4x256xf32, #tpu.memory_space<vmem>>, vector<1x4x256xf32>
    %1 = vector.shape_cast %0 : vector<1x4x256xf32> to vector<4x256xf32>
    %c0_2 = arith.constant 0 : index
    %c0_3 = arith.constant 0 : index
    %2 = vector.load %arg3[%c0_2, %c0_3] : memref<16x4xf32, #tpu.memory_space<vmem>>, vector<16x4xf32>
    %cst = arith.constant dense<0.000000e+00> : vector<16x256xf32>
    %3 = tpu.matmul %2, %1, %cst {dimension_numbers = #tpu.dot_dimension_numbers<[1], [0], [0], [1], [0, 0, 1, 1], [], []>} : vector<16x4xf32>, vector<4x256xf32>, vector<16x256xf32> -> vector<16x256xf32>
    %4 = vector.extract_strided_slice %3 {offsets = [0, 0], sizes = [8, 256], strides = [1, 1]} : vector<16x256xf32> to vector<8x256xf32>
    %c0_4 = arith.constant 0 : index
    %c0_5 = arith.constant 0 : index
    %5 = vector.load %arg4[%c0_4, %c0_5] : memref<8x1xf32, #tpu.memory_space<vmem>>, vector<8x1xf32>
    %6 = vector.broadcast %5 : vector<8x1xf32> to vector<8x256xf32>
    %7 = arith.addf %4, %6 : vector<8x256xf32>
    %cst_6 = arith.constant 0.000000e+00 : f32
    %8 = vector.broadcast %cst_6 : f32 to vector<8x256xf32>
    %9 = arith.maximumf %7, %8 : vector<8x256xf32>
    %10 = vector.extract_strided_slice %3 {offsets = [8, 0], sizes = [8, 256], strides = [1, 1]} : vector<16x256xf32> to vector<8x256xf32>
    %c0_7 = arith.constant 0 : index
    %c0_8 = arith.constant 0 : index
    %11 = vector.load %arg5[%c0_7, %c0_8] : memref<8x8xf32, #tpu.memory_space<vmem>>, vector<8x8xf32>
    %cst_9 = arith.constant dense<0.000000e+00> : vector<8x256xf32>
    %12 = tpu.matmul %11, %9, %cst_9 {dimension_numbers = #tpu.dot_dimension_numbers<[1], [0], [0], [1], [0, 0, 1, 1], [], []>} : vector<8x8xf32>, vector<8x256xf32>, vector<8x256xf32> -> vector<8x256xf32>
    %c0_10 = arith.constant 0 : index
    %c0_11 = arith.constant 0 : index
    %13 = vector.load %arg6[%c0_10, %c0_11] : memref<8x1xf32, #tpu.memory_space<vmem>>, vector<8x1xf32>
    %14 = vector.broadcast %13 : vector<8x1xf32> to vector<8x256xf32>
    %15 = arith.addf %12, %14 : vector<8x256xf32>
    %16 = arith.addf %15, %10 : vector<8x256xf32>
    %cst_12 = arith.constant 0.000000e+00 : f32
    %17 = vector.broadcast %cst_12 : f32 to vector<8x256xf32>
    %18 = arith.maximumf %16, %17 : vector<8x256xf32>
    %c0_13 = arith.constant 0 : index
    %c0_14 = arith.constant 0 : index
    %c0_15 = arith.constant 0 : index
    %19 = vector.load %arg7[%c0_13, %c0_14, %c0_15] : memref<1x8x256xf32, #tpu.memory_space<vmem>>, vector<1x8x256xf32>
    %20 = vector.shape_cast %19 : vector<1x8x256xf32> to vector<8x256xf32>
    %21 = vector.shape_cast %18 : vector<8x256xf32> to vector<1x8x256xf32>
    tpu.vector_store %arg7[%c0_13, %c0_14, %c0_15], %21 {strides = array<i32>} : memref<1x8x256xf32, #tpu.memory_space<vmem>>, vector<1x8x256xf32>,
    return
  }
  func.func @transform_0(%arg0: i32, %arg1: i32) -> (i32, i32, i32) {
    %c0_i32 = arith.constant 0 : i32
    %c0_i32_0 = arith.constant 0 : i32
    return %arg1, %c0_i32, %arg0 : i32, i32, i32
  }
  func.func @transform_1(%arg0: i32, %arg1: i32) -> (i32, i32) {
    %c0_i32 = arith.constant 0 : i32
    %c0_i32_0 = arith.constant 0 : i32
    %c0_i32_1 = arith.constant 0 : i32
    return %c0_i32, %c0_i32_0 : i32, i32
  }
  func.func @transform_2(%arg0: i32, %arg1: i32) -> (i32, i32) {
    %c0_i32 = arith.constant 0 : i32
    %c0_i32_0 = arith.constant 0 : i32
    %c0_i32_1 = arith.constant 0 : i32
    return %c0_i32, %c0_i32_0 : i32, i32
  }
  func.func @transform_3(%arg0: i32, %arg1: i32) -> (i32, i32) {
    %c0_i32 = arith.constant 0 : i32
    %c0_i32_0 = arith.constant 0 : i32
    %c0_i32_1 = arith.constant 0 : i32
    return %c0_i32, %c0_i32_0 : i32, i32
  }
  func.func @transform_4(%arg0: i32, %arg1: i32) -> (i32, i32) {
    %c0_i32 = arith.constant 0 : i32
    %c0_i32_0 = arith.constant 0 : i32
    %c0_i32_1 = arith.constant 0 : i32
    return %c0_i32, %c0_i32_0 : i32, i32
  }
  func.func @transform_5(%arg0: i32, %arg1: i32) -> (i32, i32, i32) {
    %c0_i32 = arith.constant 0 : i32
    %c0_i32_0 = arith.constant 0 : i32
    return %arg1, %c0_i32, %arg0 : i32, i32, i32
  }
}

</mosaic_0001>

<llo_original>
// kernel: tpu_custom_call.1
$region0: #{tpu_custom_call.1}
  #allocation0 [shape = 'u32[]', space=smem, size = 0x4, offset = 0x4, fixed_abs, tag = 'smem constant byte address 0x4 - core index']
  #allocation1 [shape = 'u32[72,128]{1,0:T(1,128)}', space=vmem, size = 0x9000, scoped, tag = 'internal scratch']
  %s0 = inlined_call_operand.vmem [shape: f32[2,4,256], index: 0, kind: input, shape index: {}]
  %s1 = inlined_call_operand.vmem [shape: f32[16,4], index: 1, kind: input, shape index: {}]
  %s2 = inlined_call_operand.vmem [shape: f32[8,1], index: 2, kind: input, shape index: {}]
  %s3 = inlined_call_operand.vmem [shape: f32[8,8], index: 3, kind: input, shape index: {}]
  %s4 = inlined_call_operand.vmem [shape: f32[8,1], index: 4, kind: input, shape index: {}]
  %s5 = inlined_call_operand.hbm [shape: f32[2,8,256], index: 5, kind: output, shape index: {}]
  %s6 = sld [smem:[#allocation0]]
  $region53: #{tpu_custom_call.1} parent=0
    _
  %s8 = ssub.s32 1, %s6
  %s9 = scalar_select 0, %s8, %s6
  $region1: #{tpu_custom_call.1} parent=0
    #allocation2 [shape = 'u8[16384]{0}', space=vmem, size = 0x4000, scoped, tag = 'output window, operand 0']
    #allocation3 [shape = 's32[2]{0}', space=sflag, size = 0x8, scoped, tag = 'scoped memory for tpu_custom_call.1']
    %10 = vsyncpa [#allocation3], 0
    %s11 = scalar_lea.sflag [#allocation3], 1
    %12 = vsyncpa %s11, 0
    loop: start=0, step=1, limit=4
    $region2: #{tpu_custom_call.1} parent=1 // loop_pre_header
      _
    $region3: #{tpu_custom_call.1} parent=1 // loop_header
      %s14 = sphi 0, %s18
      %p15 = scmp.ge.s32.totalorder %s14, 4
      %s21 = sphi 0, %s33
      %s22 = sphi 0, %s29
      %s23 = sphi 0, %s21
      %s24 = sphi 0, %s22
      %s25 = sphi 0, %s23
      %s26 = sphi 0, %s24
      %s38 = sphi 0, %s40
      %s41 = sphi 0, %s38
      %s42 = sphi 0, %s41
      %s58 = sphi 0, %s42
      %s62 = sphi 0, %s62
      %s64 = sphi 0, %s62
      %s65 = sphi 0, %s64
      %s79 = sphi 0, %s65
      %s83 = sphi 0, %s83
      %s85 = sphi 0, %s83
      %s86 = sphi 0, %s85
      %s100 = sphi 0, %s86
      %s104 = sphi 0, %s104
      %s106 = sphi 0, %s104
      %s107 = sphi 0, %s106
      %s121 = sphi 0, %s107
      %s125 = sphi 0, %s125
      %s127 = sphi 0, %s125
      %s128 = sphi 0, %s127
      %s142 = sphi 0, %s128
      %s150 = sphi 0, %s152
      %s153 = sphi 0, %s150
      %s154 = sphi 0, %s153
      %s170 = sphi 0, %s154
    $region4: #{tpu_custom_call.1} parent=1 // loop_header_branch
      %17 = sbr.rel (%p15) target = $region8
    $region5: #{tpu_custom_call.1} parent=1 // loop_body
      %s19 = ssub.s32 %s14, 1
      %s20 = ssub.s32 %s14, 2
      %s27 = sadd.s32 1, %s22
      %p28 = scmp.ge.s32.totalorder %s27, 2
      %s29 = scalar_select %p28, 0, %s27
      %s30 = sadd.s32 1, %s21
      %s31 = scalar_select %p28, %s30, %s21
      %p32 = scmp.ge.s32.totalorder %s31, 1
      %s33 = scalar_select %p32, 0, %s31
      %s34 = ssub.s32 %s22, %s29
      %s35 = ssub.s32 %s21, %s33
      %s36 = sor.u32 %s34, %s35
      %p37 = scmp.eq.s32.totalorder %s36, 0
      %s39 = sadd.s32 %s38, 1
      %s40 = scalar_select %p37, %s38, %s39
      %p43 = pneg %p37
      %p44 = scmp.eq.s32.totalorder %s14, 1
      %p45 = por %p43, %p44
      %p46 = scmp.ne.s32.totalorder %s38, %s41
      %p47 = scmp.eq.s32.totalorder %s14, 0
      %p48 = por %p46, %p47
      %p49 = scmp.ne.s32.totalorder %s38, %s41
      %p50 = scmp.eq.s32.totalorder %s19, 1
      %p51 = por %p49, %p50
      %p52 = scmp.ne.s32.totalorder %s41, %s42
      %p53 = scmp.eq.s32.totalorder %s19, 0
      %p54 = por %p52, %p53
      %p55 = scmp.ne.s32.totalorder %s41, %s42
      %p56 = scmp.eq.s32.totalorder %s20, 1
      %p57 = por %p55, %p56
      %p59 = scmp.ne.s32.totalorder %s42, %s58
      %p60 = scmp.eq.s32.totalorder %s20, 0
      %p61 = por %p59, %p60
      %s63 = sadd.s32 %s62, 1
      %p66 = scmp.eq.s32.totalorder %s14, 1
      %p67 = scmp.ne.s32.totalorder %s62, %s64
      %p68 = scmp.eq.s32.totalorder %s14, 0
      %p69 = por %p67, %p68
      %p70 = scmp.ne.s32.totalorder %s62, %s64
      %p71 = scmp.eq.s32.totalorder %s19, 1
      %p72 = por %p70, %p71
      %p73 = scmp.ne.s32.totalorder %s64, %s65
      %p74 = scmp.eq.s32.totalorder %s19, 0
      %p75 = por %p73, %p74
      %p76 = scmp.ne.s32.totalorder %s64, %s65
      %p77 = scmp.eq.s32.totalorder %s20, 1
      %p78 = por %p76, %p77
      %p80 = scmp.ne.s32.totalorder %s65, %s79
      %p81 = scmp.eq.s32.totalorder %s20, 0
      %p82 = por %p80, %p81
      %s84 = sadd.s32 %s83, 1
      %p87 = scmp.eq.s32.totalorder %s14, 1
      %p88 = scmp.ne.s32.totalorder %s83, %s85
      %p89 = scmp.eq.s32.totalorder %s14, 0
      %p90 = por %p88, %p89
      %p91 = scmp.ne.s32.totalorder %s83, %s85
      %p92 = scmp.eq.s32.totalorder %s19, 1
      %p93 = por %p91, %p92
      %p94 = scmp.ne.s32.totalorder %s85, %s86
      %p95 = scmp.eq.s32.totalorder %s19, 0
      %p96 = por %p94, %p95
      %p97 = scmp.ne.s32.totalorder %s85, %s86
      %p98 = scmp.eq.s32.totalorder %s20, 1
      %p99 = por %p97, %p98
      %p101 = scmp.ne.s32.totalorder %s86, %s100
      %p102 = scmp.eq.s32.totalorder %s20, 0
      %p103 = por %p101, %p102
      %s105 = sadd.s32 %s104, 1
      %p108 = scmp.eq.s32.totalorder %s14, 1
      %p109 = scmp.ne.s32.totalorder %s104, %s106
      %p110 = scmp.eq.s32.totalorder %s14, 0
      %p111 = por %p109, %p110
      %p112 = scmp.ne.s32.totalorder %s104, %s106
      %p113 = scmp.eq.s32.totalorder %s19, 1
      %p114 = por %p112, %p113
      %p115 = scmp.ne.s32.totalorder %s106, %s107
      %p116 = scmp.eq.s32.totalorder %s19, 0
      %p117 = por %p115, %p116
      %p118 = scmp.ne.s32.totalorder %s106, %s107
      %p119 = scmp.eq.s32.totalorder %s20, 1
      %p120 = por %p118, %p119
      %p122 = scmp.ne.s32.totalorder %s107, %s121
      %p123 = scmp.eq.s32.totalorder %s20, 0
      %p124 = por %p122, %p123
      %s126 = sadd.s32 %s125, 1
      %p129 = scmp.eq.s32.totalorder %s14, 1
      %p130 = scmp.ne.s32.totalorder %s125, %s127
      %p131 = scmp.eq.s32.totalorder %s14, 0
      %p132 = por %p130, %p131
      %p133 = scmp.ne.s32.totalorder %s125, %s127
      %p134 = scmp.eq.s32.totalorder %s19, 1
      %p135 = por %p133, %p134
      %p136 = scmp.ne.s32.totalorder %s127, %s128
      %p137 = scmp.eq.s32.totalorder %s19, 0
      %p138 = por %p136, %p137
      %p139 = scmp.ne.s32.totalorder %s127, %s128
      %p140 = scmp.eq.s32.totalorder %s20, 1
      %p141 = por %p139, %p140
      %p143 = scmp.ne.s32.totalorder %s128, %s142
      %p144 = scmp.eq.s32.totalorder %s20, 0
      %p145 = por %p143, %p144
      %s146 = ssub.s32 %s22, %s29
      %s147 = ssub.s32 %s21, %s33
      %s148 = sor.u32 %s146, %s147
      %p149 = scmp.eq.s32.totalorder %s148, 0
      %s151 = sadd.s32 %s150, 1
      %s152 = scalar_select %p149, %s150, %s151
      %p155 = pneg %p149
      %p156 = scmp.eq.s32.totalorder %s14, 1
      %p157 = por %p155, %p156
      %p158 = scmp.ne.s32.totalorder %s150, %s153
      %p159 = scmp.eq.s32.totalorder %s14, 0
      %p160 = por %p158, %p159
      %p161 = scmp.ne.s32.totalorder %s150, %s153
      %p162 = scmp.eq.s32.totalorder %s19, 1
      %p163 = por %p161, %p162
      %p164 = scmp.ne.s32.totalorder %s153, %s154
      %p165 = scmp.eq.s32.totalorder %s19, 0
      %p166 = por %p164, %p165
      %p167 = scmp.ne.s32.totalorder %s153, %s154
      %p168 = scmp.eq.s32.totalorder %s20, 1
      %p169 = por %p167, %p168
      %p171 = scmp.ne.s32.totalorder %s154, %s170
      %p172 = scmp.eq.s32.totalorder %s20, 0
      %p173 = por %p171, %p172
      %p174 = scmp.le.s32.totalorder 1, %s14
      %p175 = scmp.lt.s32.totalorder %s14, 3
      %p176 = pnand %p174, %p175
      %p177 = pneg %p176
      // Predicated region
      $region9: #{tpu_custom_call.1} parent=5 // pred_check
        _
      $region10: #{tpu_custom_call.1} parent=5 // pred_check_branch
        %179 = sbr.rel (%p176) target = $region12
      $region11: #{tpu_custom_call.1} parent=5 // pred_region
        %s180 = ssub.s32 %s14, 1
        // Predicated region
        $region13: #{tpu_custom_call.1} parent=11 // pred_check
          %p181 = pneg %p75
        $region14: #{tpu_custom_call.1} parent=11 // pred_check_branch
          %183 = sbr.rel (%p181) target = $region16
        $region15: #{tpu_custom_call.1} parent=11 // pred_region
          _
        $region16: #{tpu_custom_call.1} parent=11 // pred_fallthru
          _
        // Predicated region
        $region17: #{tpu_custom_call.1} parent=11 // pred_check
          %p184 = pneg %p96
        $region18: #{tpu_custom_call.1} parent=11 // pred_check_branch
          %186 = sbr.rel (%p184) target = $region20
        $region19: #{tpu_custom_call.1} parent=11 // pred_region
          _
        $region20: #{tpu_custom_call.1} parent=11 // pred_fallthru
          _
        // Predicated region
        $region21: #{tpu_custom_call.1} parent=11 // pred_check
          %p187 = pneg %p117
        $region22: #{tpu_custom_call.1} parent=11 // pred_check_branch
          %189 = sbr.rel (%p187) target = $region24
        $region23: #{tpu_custom_call.1} parent=11 // pred_region
          _
        $region24: #{tpu_custom_call.1} parent=11 // pred_fallthru
          _
        // Predicated region
        $region25: #{tpu_custom_call.1} parent=11 // pred_check
          %p190 = pneg %p138
        $region26: #{tpu_custom_call.1} parent=11 // pred_check_branch
          %192 = sbr.rel (%p190) target = $region28
        $region27: #{tpu_custom_call.1} parent=11 // pred_region
          _
        $region28: #{tpu_custom_call.1} parent=11 // pred_fallthru
          _
      $region12: #{tpu_custom_call.1} parent=5 // pred_fallthru
        _
      %p193 = scmp.lt.s32.totalorder %s14, 2
      // Predicated region
      $region29: #{tpu_custom_call.1} parent=5 // pred_check
        %p194 = pneg %p193
      $region30: #{tpu_custom_call.1} parent=5 // pred_check_branch
        %196 = sbr.rel (%p194) target = $region32
      $region31: #{tpu_custom_call.1} parent=5 // pred_region
        // Predicated region
        $region33: #{tpu_custom_call.1} parent=31 // pred_check
          %p197 = pneg %p48
        $region34: #{tpu_custom_call.1} parent=31 // pred_check_branch
          %199 = sbr.rel (%p197) target = $region36
        $region35: #{tpu_custom_call.1} parent=31 // pred_region
          %s200 = smul.u32 2, %s21
          %p201 = scmp.lt.s32.totalorder %s22, 1
          %s202 = scalar_select %p201, %s22, 1
          %p203 = scmp.lt.s32.totalorder %s200, 1
          %s204 = scalar_select %p203, %s200, 1
          %s205 = smul.addr %s202, 2
          %s206 = sadd.s32 %s204, %s205
          %s207 = smul.addr %s206, 4
          %s208 = scalar_lea.vmem %s0, %s207
          %s209 = smul.u32 2, %s21
        $region36: #{tpu_custom_call.1} parent=31 // pred_fallthru
          _
      $region32: #{tpu_custom_call.1} parent=5 // pred_fallthru
        _
      %p210 = scmp.le.s32.totalorder 1, %s14
      %p211 = scmp.lt.s32.totalorder %s14, 3
      %p212 = pnand %p210, %p211
      %p213 = pneg %p212
      // Predicated region
      $region37: #{tpu_custom_call.1} parent=5 // pred_check
        _
      $region38: #{tpu_custom_call.1} parent=5 // pred_check_branch
        %215 = sbr.rel (%p212) target = $region40
      $region39: #{tpu_custom_call.1} parent=5 // pred_region
        %s216 = ssub.s32 %s14, 1
        %s217 = smul.u32 2, %s23
        %p218 = scmp.lt.s32.totalorder %s24, 1
        %s219 = scalar_select %p218, %s24, 1
        %p220 = scmp.lt.s32.totalorder %s217, 1
        %s221 = scalar_select %p220, %s217, 1
        %s222 = smul.addr %s219, 2
        %s223 = sadd.s32 %s221, %s222
        %s224 = smul.addr %s223, 4
        %s225 = scalar_lea.vmem %s0, %s224
        %p226 = pneg %p54
        %p227 = pneg %p51
        %p228 = pneg %p75
        %p229 = pneg %p72
        %p230 = pneg %p96
        %p231 = pneg %p93
        %p232 = pneg %p117
        %p233 = pneg %p114
        %p234 = pneg %p138
        %p235 = pneg %p135
        %p236 = pneg %p166
        %p237 = pneg %p163
        %s238 = sand.u32 %s153, 1
        %s239 = scalar_lea.sflag [#allocation3], %s238
        %s240 = sand.u32 %s153, 1
        %s241 = smul.addr %s240, 16
        %s242 = scalar_lea.vmem [#allocation2], %s241
        %s243 = smul.u32 2, %s23
        %p244 = scmp.lt.s32.totalorder %s24, 1
        %s245 = scalar_select %p244, %s24, 1
        %p246 = scmp.lt.s32.totalorder %s243, 1
        %s247 = scalar_select %p246, %s243, 1
        %s248 = smul.addr %s245, 2
        %s249 = sadd.s32 %s247, %s248
        %s250 = smul.addr %s249, 4
        %s251 = scalar_lea.vmem %s0, %s250
        %s252 = smul.u32 2, %s23
        %s253 = smul.u32 2, %s23
        %v254 = vld [vmem:[%s251] sm:$0xff]
        %v255 = vld [vmem:[%s1] sm:$0xff]
        %v256 = vld [vmem:[%s1 + $0x8] sm:$0xff]
        %258 = vst [vmem:[#allocation1] ss:$2 sm:$0xff] %v254
        %v259 = vld.sshfl [vmem:[#allocation1] sm:$0xff pattern:$0x75316420]
        %v260 = vld.sshfl [vmem:[#allocation1 + $0x8] sm:$0xff pattern:$0x75316420]
        %vm261 = vcmask 31744
        %v263 = vsel %vm261, %v255, 0
        %v266 = vsel %vm261, %v256, 0
        %vm268 = vcmask 1043456
        %v269 = vsel %vm268, %v259, 0
        %v271 = vsel %vm268, %v260, 0
        %273 = vmatpush.msra.mxu0 0.0
        %274 = vmatpush.msra.mxu0 0.0
        %275 = vmatpush.msra.mxu0 0.0
        %276 = vmatpush.msra.mxu0 0.0
        %277 = vmatpush.msra.mxu0 0.0
        %278 = vmatpush.msra.mxu0 0.0
        %279 = vmatpush.msra.mxu0 0.0
        %280 = vmatpush.msra.mxu0 0.0
        %281 = vmatpush.msra.mxu0 0.0
        %282 = vmatpush.msra.mxu0 0.0
        %283 = vmatpush.msra.mxu0 0.0
        %284 = vmatpush.msra.mxu0 0.0
        %285 = vmatpush.msra.mxu0 0.0
        %286 = vmatpush.msra.mxu0 0.0
        %287 = vmatpush.msra.mxu0 0.0
        %288 = vmatpush.msra.mxu0 %v269
        %289 = vmatmul.f32.gmra.mxu0 %v263
        %v290 = vpop.f32.mrf.mxu0
        %v291 = vadd.f32 0.0, %v290
        %292 = vmatmul.f32.gmra.mxu0 %v266
        %v293 = vpop.f32.mrf.mxu0
        %v294 = vadd.f32 0.0, %v293
        %295 = vdwg.mxu0
        %296 = vmatpush.msra.mxu0 0.0
        %297 = vmatpush.msra.mxu0 0.0
        %298 = vmatpush.msra.mxu0 0.0
        %299 = vmatpush.msra.mxu0 0.0
        %300 = vmatpush.msra.mxu0 0.0
        %301 = vmatpush.msra.mxu0 0.0
        %302 = vmatpush.msra.mxu0 0.0
        %303 = vmatpush.msra.mxu0 0.0
        %304 = vmatpush.msra.mxu0 0.0
        %305 = vmatpush.msra.mxu0 0.0
        %306 = vmatpush.msra.mxu0 0.0
        %307 = vmatpush.msra.mxu0 0.0
        %308 = vmatpush.msra.mxu0 0.0
        %309 = vmatpush.msra.mxu0 0.0
        %310 = vmatpush.msra.mxu0 0.0
        %311 = vmatpush.msra.mxu0 %v271
        %312 = vmatmul.f32.gmra.mxu0 %v263
        %v313 = vpop.f32.mrf.mxu0
        %v314 = vadd.f32 0.0, %v313
        %315 = vmatmul.f32.gmra.mxu0 %v266
        %v316 = vpop.f32.mrf.mxu0
        %v317 = vadd.f32 0.0, %v316
        %318 = vdwg.mxu0
        %v319 = vld [vmem:[%s2] sm:$0xff]
        %321 = vset.pattern.permute.xlu0 0
        %322 = vperm.xlu0 %321, %v319
        %v323 = vpop.permute.xlu0 %322
        %v325 = vadd.f32 %v291, %v323
        %v326 = vadd.f32 %v314, %v323
        %v327 = vmax.f32 %v325, 0.0
        %v328 = vmax.f32 %v326, 0.0
        %v329 = vld [vmem:[%s3] sm:$0xff]
        %v330 = vld [vmem:[%s4] sm:$0xff]
        %332 = vset.pattern.permute.xlu0 0
        %333 = vperm.xlu0 %332, %v330
        %v334 = vpop.permute.xlu0 %333
        %vm336 = vcmask 64512
        %v338 = vsel %vm336, %v329, 0
        %340 = vmatpush.msra.mxu0 0.0
        %341 = vmatpush.msra.mxu0 0.0
        %342 = vmatpush.msra.mxu0 0.0
        %343 = vmatpush.msra.mxu0 0.0
        %344 = vmatpush.msra.mxu0 0.0
        %345 = vmatpush.msra.mxu0 0.0
        %346 = vmatpush.msra.mxu0 0.0
        %347 = vmatpush.msra.mxu0 0.0
        %348 = vmatpush.msra.mxu0 0.0
        %349 = vmatpush.msra.mxu0 0.0
        %350 = vmatpush.msra.mxu0 0.0
        %351 = vmatpush.msra.mxu0 0.0
        %352 = vmatpush.msra.mxu0 0.0
        %353 = vmatpush.msra.mxu0 0.0
        %354 = vmatpush.msra.mxu0 0.0
        %355 = vmatpush.msra.mxu0 %v327
        %356 = vmatmul.f32.gmra.mxu0 %v338
        %v357 = vpop.f32.mrf.mxu0
        %v358 = vadd.f32 %v334, %v357
        %359 = vdwg.mxu0
        %360 = vmatpush.msra.mxu0 0.0
        %361 = vmatpush.msra.mxu0 0.0
        %362 = vmatpush.msra.mxu0 0.0
        %363 = vmatpush.msra.mxu0 0.0
        %364 = vmatpush.msra.mxu0 0.0
        %365 = vmatpush.msra.mxu0 0.0
        %366 = vmatpush.msra.mxu0 0.0
        %367 = vmatpush.msra.mxu0 0.0
        %368 = vmatpush.msra.mxu0 0.0
        %369 = vmatpush.msra.mxu0 0.0
        %370 = vmatpush.msra.mxu0 0.0
        %371 = vmatpush.msra.mxu0 0.0
        %372 = vmatpush.msra.mxu0 0.0
        %373 = vmatpush.msra.mxu0 0.0
        %374 = vmatpush.msra.mxu0 0.0
        %375 = vmatpush.msra.mxu0 %v328
        %376 = vmatmul.f32.gmra.mxu0 %v338
        %v377 = vpop.f32.mrf.mxu0
        %v378 = vadd.f32 %v334, %v377
        %379 = vdwg.mxu0
        %v380 = vadd.f32 %v358, %v294
        %v381 = vadd.f32 %v378, %v317
        %v382 = vmax.f32 %v380, 0.0
        %v383 = vmax.f32 %v381, 0.0
        %384 = vst [vmem:[%s242] sm:$0xff] %v382
        %385 = vst [vmem:[%s242 + $0x8] sm:$0xff] %v383
        %s386 = sand.u32 %s153, 1
        %s387 = scalar_lea.sflag [#allocation3], %s386
        %s388 = sand.u32 %s153, 1
        %s389 = smul.addr %s388, 16
        %s390 = scalar_lea.vmem [#allocation2], %s389
        // Predicated region
        $region41: #{tpu_custom_call.1} parent=39 // pred_check
          %p391 = pneg %p163
        $region42: #{tpu_custom_call.1} parent=39 // pred_check_branch
          %393 = sbr.rel (%p391) target = $region44
        $region43: #{tpu_custom_call.1} parent=39 // pred_region
          %s394 = smul.u32 2, %s23
          %396 = vsyncadd %s387, 0
          %s397 = smul.addr %s24, 2
          %s398 = sadd.s32 %s394, %s397
          %s399 = smul.addr %s398, 8
          %s400 = scalar_lea.hbm %s5, %s399
          %s402 = sshll.u32 %s390, 4
          %s403 = int_to_ptr.vmem [resolvable:$true] %s402
          %s404 = sshll.u32 %s400, 4
          %s405 = int_to_ptr.hbm [resolvable:$true] %s404
          %407 = dma.vmem_to_hbm [thread:$0]  %s403, 256, %s405, %s387
        $region44: #{tpu_custom_call.1} parent=39 // pred_fallthru
          _
      $region40: #{tpu_custom_call.1} parent=5 // pred_fallthru
        _
      %p408 = scmp.le.s32.totalorder 2, %s14
      // Predicated region
      $region45: #{tpu_custom_call.1} parent=5 // pred_check
        %p409 = pneg %p408
      $region46: #{tpu_custom_call.1} parent=5 // pred_check_branch
        %411 = sbr.rel (%p409) target = $region48
      $region47: #{tpu_custom_call.1} parent=5 // pred_region
        %s412 = ssub.s32 %s14, 2
        // Predicated region
        $region49: #{tpu_custom_call.1} parent=47 // pred_check
          %p413 = pneg %p169
        $region50: #{tpu_custom_call.1} parent=47 // pred_check_branch
          %415 = sbr.rel (%p413) target = $region52
        $region51: #{tpu_custom_call.1} parent=47 // pred_region
          %s416 = sand.u32 %s154, 1
          %s417 = scalar_lea.sflag [#allocation3], %s416
          %s418 = sand.u32 %s154, 1
          %s419 = smul.addr %s418, 16
          %s420 = scalar_lea.vmem [#allocation2], %s419
          %422 = dma.done %s417, 256
        $region52: #{tpu_custom_call.1} parent=47 // pred_fallthru
          _
      $region48: #{tpu_custom_call.1} parent=5 // pred_fallthru
        _
    $region6: #{tpu_custom_call.1} parent=1 // loop_footer
      %s18 = sadd.s32 1, %s14
    $region7: #{tpu_custom_call.1} parent=1 // loop_footer_branch
      %13 = sbr.rel target = $region3
    $region8: #{tpu_custom_call.1} parent=1 // loop_exit
      _
    %423 = vsyncpa [#allocation3], 1
    %s424 = scalar_lea.sflag [#allocation3], 1
    %425 = vsyncpa %s424, 1

</llo_original>
